<compile_context>
chip_gen: v6e
topology: v6e:2x2x1
jax: 0.10.0
libtpu: 0.0.40
codegen_flags: <defaults>
</compile_context>

<pallas_src>
import jax
import jax.numpy as jnp
from jax import lax
from jax.experimental import pallas as pl
from jax.experimental.pallas import tpu as pltpu
import numpy as np


# ---------------------------------------------------------------------------
# Wrapper-side glue
# ---------------------------------------------------------------------------
def _maxpool1d_ceil(x, pool):
    """MaxPool1d(pool, ceil_mode=True) on NCW input (tiny XLA glue: pad/reshape/max)."""
    if pool <= 1:
        return x
    n, c, l = x.shape
    l_out = -(-l // pool)
    pad = l_out * pool - l
    if pad:
        x = jnp.pad(x, ((0, 0), (0, 0), (0, pad)), constant_values=-jnp.inf)
    return jnp.max(x.reshape(n, c, l_out, pool), axis=-1)


def _choose_l_tile(l_out, c_in, c_out, k, in_isz, out_isz,
                   per_step_budget=12 << 20):
    """Largest lane-dense (multiple-of-128) L tile whose per-step footprint fits the budget.

    Budget is conservative so that double-buffered tiles + weights + in-kernel scratch stay
    well inside v7x's 64 MiB physical VMEM (and the 32 MiB default scoped limit elsewhere).
    """
    l_cover = 128 * pl.cdiv(l_out, 128)

    def footprint(lt):
        xm = c_in * (lt + k - 1) * in_isz          # input tile
        out = c_out * lt * out_isz                 # output tile
        w = (c_out * k * c_in + c_out * c_in) * in_isz
        rhs = k * c_in * lt * in_isz               # in-kernel im2col
        acc = c_out * lt * 4                       # f32 accumulator
        return 2 * (xm + out) + 2 * w + rhs + acc  # 2x = double buffering

    lt = 128
    while lt * 2 <= min(l_cover, 2048) and footprint(lt * 2) <= per_step_budget:
        lt *= 2
    return lt


# ---------------------------------------------------------------------------
# Kernels
# ---------------------------------------------------------------------------
def _make_kernel(k_taps, l_tile, c_in, residual):
    """Conv (single deep matmul) + bias + ReLU [+ 1x1-conv residual add] on one L tile."""

    def _im2col(xm):
        # xm: (C_in, L_TILE + K - 1) -> (K*C_in, L_TILE); built once, then one MXU dot.
        return jnp.concatenate([xm[:, t:t + l_tile] for t in range(k_taps)], axis=0)

    if residual:
        def kernel(xm_ref, w_ref, b_ref, wr_ref, br_ref, o_ref):
            xm = xm_ref[0, 0]                                       # (C_in, Lb)
            rhs = _im2col(xm)                                       # (K*C_in, L_TILE)
            acc = jnp.dot(w_ref[...], rhs, preferred_element_type=jnp.float32)
            acc = jnp.maximum(acc + b_ref[...], 0.0)                # bias + ReLU (f32)
            # residual: 1x1 conv over xm[:, K-1 : K-1+L_TILE] == last tap block of rhs
            res = jnp.dot(wr_ref[...], rhs[(k_taps - 1) * c_in:, :],
                          preferred_element_type=jnp.float32) + br_ref[...]
            o_ref[0] = (acc + res).astype(o_ref.dtype)
        return kernel

    def kernel(xm_ref, w_ref, b_ref, o_ref):
        xm = xm_ref[0, 0]
        rhs = _im2col(xm)
        acc = jnp.dot(w_ref[...], rhs, preferred_element_type=jnp.float32)
        o_ref[0] = jnp.maximum(acc + b_ref[...], 0.0).astype(o_ref.dtype)
    return kernel


# ---------------------------------------------------------------------------
# Public forward
# ---------------------------------------------------------------------------
def convolutional_ar_block(x, params, *, kernel_size, pooling=1, stride=1,
                           residual=False, compute_dtype=jnp.float32):
    """Forward pass of ConvolutionalArBlock (NCW input).

    compute_dtype: dtype of the matmul operands (bf16 recommended on v6e/v7x);
    accumulation, bias, ReLU and the residual add always run in float32.
    """
    assert stride == 1, "kernel implements stride=1 (module default)"
    # TODO(synk): batch_norm / SelfAttention / dropout variants not implemented (off by default).
    w_main, b_main = params["w_main"], params["b_main"]
    c_out, c_in, k = w_main.shape
    assert k == kernel_size

    # --- pooling (XLA glue; pooling first also shrinks downstream DMA bytes by `pooling`x)
    xm = _maxpool1d_ceil(x, pooling)
    n, _, l_pool = xm.shape
    l_out = l_pool - k + 1
    assert l_out >= 1

    out_dtype = x.dtype
    in_isz = jnp.dtype(compute_dtype).itemsize
    out_isz = jnp.dtype(out_dtype).itemsize

    # --- lane-dense L tiling with halo = K-1
    l_tile = _choose_l_tile(l_out, c_in, c_out, k, in_isz, out_isz)
    t_tiles = pl.cdiv(l_out, l_tile)
    l_out_pad = t_tiles * l_tile
    lb = l_tile + k - 1

    xm = xm.astype(compute_dtype)
    pad = l_out_pad + k - 1 - l_pool
    if pad:
        xm = jnp.pad(xm, ((0, 0), (0, 0), (0, pad)))       # padded cols are cropped later
    if t_tiles == 1:
        xm_tiles = xm[:, None]                              # (N, 1, C_in, Lb)
    else:
        idx = (jnp.arange(t_tiles) * l_tile)[:, None] + jnp.arange(lb)[None, :]
        xm_tiles = jnp.transpose(xm[:, :, idx], (0, 2, 1, 3))  # (N, T, C_in, Lb)

    # --- weights: stack the K taps for one deep-contraction matmul
    # w_stk[o, k*C_in + c] = w_main[o, c, k]  (matches im2col row ordering)
    w_stk = jnp.transpose(w_main, (0, 2, 1)).reshape(c_out, k * c_in).astype(compute_dtype)
    b_col = b_main.reshape(c_out, 1).astype(jnp.float32)

    inputs = [xm_tiles, w_stk, b_col]
    in_specs = [
        pl.BlockSpec((1, 1, c_in, lb), lambda i, j: (i, j, 0, 0)),
        pl.BlockSpec((c_out, k * c_in), lambda i, j: (0, 0)),
        pl.BlockSpec((c_out, 1), lambda i, j: (0, 0)),
    ]

    if residual:
        if params.get("w_res", None) is not None:
            wr = params["w_res"].reshape(c_out, c_in).astype(compute_dtype)
            br = params["b_res"].reshape(c_out, 1).astype(jnp.float32)
        else:
            # module skips the 1x1 conv when in_channels == out_channels -> identity residual
            assert c_in == c_out, "identity residual requires in_channels == out_channels"
            wr = jnp.eye(c_out, dtype=compute_dtype)
            br = jnp.zeros((c_out, 1), jnp.float32)
        inputs += [wr, br]
        in_specs += [
            pl.BlockSpec((c_out, c_in), lambda i, j: (0, 0)),
            pl.BlockSpec((c_out, 1), lambda i, j: (0, 0)),
        ]

    kernel = _make_kernel(k, l_tile, c_in, residual)

    # Explicit scoped-VMEM budget (v7x has only 64 MiB physical; keep well under).
    est = (2 * c_in * lb * in_isz + 2 * c_out * l_tile * out_isz
           + 2 * (c_out * k * c_in + c_out * c_in) * in_isz
           + k * c_in * l_tile * in_isz + c_out * l_tile * 4 + (1 << 20))
    vmem_limit = int(min(max(4 * est, 16 << 20), 48 << 20))

    out = pl.pallas_call(
        kernel,
        out_shape=jax.ShapeDtypeStruct((n, c_out, l_out_pad), out_dtype),
        grid_spec=pltpu.PrefetchScalarGridSpec(
            num_scalar_prefetch=0,
            grid=(n, t_tiles),                               # (batch, L-tiles), both parallel
            in_specs=in_specs,
            out_specs=pl.BlockSpec((1, c_out, l_tile), lambda i, j: (i, 0, j)),
        ),
        compiler_params=pltpu.CompilerParams(
            dimension_semantics=("parallel", "parallel"),
            vmem_limit_bytes=vmem_limit),
    )(*inputs)

    return out[:, :, :l_out]


# ---------------------------------------------------------------------------
# Pure-JAX reference (matches the PyTorch forward)
# ---------------------------------------------------------------------------
def _reference(x, params, *, kernel_size, pooling, stride, residual):
    xm = _maxpool1d_ceil(x, pooling)
    y = lax.conv_general_dilated(xm, params["w_main"], (stride,), "VALID",
                                 dimension_numbers=("NCH", "OIH", "NCH"))
    y = y + params["b_main"][None, :, None]
    y = jnp.maximum(y, 0.0)
    if residual:
        r = _maxpool1d_ceil(x, pooling * stride)
        if params.get("w_res", None) is not None:
            r = lax.conv_general_dilated(r, params["w_res"], (1,), "VALID",
                                         dimension_numbers=("NCH", "OIH", "NCH"))
            r = r + params["b_res"][None, :, None]
        y = y + r[:, :, -y.shape[2]:]
    return y


if __name__ == "__main__":
    key = jax.random.PRNGKey(0)
    k_x, k_w, k_b, k_wr, k_br, k_x2, k_w2, k_b2 = jax.random.split(key, 8)

    N, C_IN, C_OUT, L, KS, POOL = 2, 4, 8, 16, 3, 2

    x = jax.random.normal(k_x, (N, C_IN, L), dtype=jnp.float32)
    params = {
        "w_main": 0.2 * jax.random.normal(k_w, (C_OUT, C_IN, KS), jnp.float32),
        "b_main": 0.1 * jax.random.normal(k_b, (C_OUT,), jnp.float32),
        "w_res": 0.2 * jax.random.normal(k_wr, (C_OUT, C_IN, 1), jnp.float32),
        "b_res": 0.1 * jax.random.normal(k_br, (C_OUT,), jnp.float32),
    }

    # Config 1: pooling=2, residual=True (1x1-conv residual), f32 matmuls -> tight check.
    out = jax.block_until_ready(convolutional_ar_block(
        x, params, kernel_size=KS, pooling=POOL, residual=True))
    ref = _reference(x, params, kernel_size=KS, pooling=POOL, stride=1, residual=True)
    np.testing.assert_allclose(np.asarray(out), np.asarray(ref), rtol=1e-5, atol=1e-5)

    # Config 2: module defaults (pooling=1, residual=False): Conv1d -> ReLU.
    out2 = jax.block_until_ready(convolutional_ar_block(
        x, params, kernel_size=KS, pooling=1, residual=False))
    ref2 = _reference(x, params, kernel_size=KS, pooling=1, stride=1, residual=False)
    np.testing.assert_allclose(np.asarray(out2), np.asarray(ref2), rtol=1e-5, atol=1e-5)

    # Config 3: residual with in_channels == out_channels (module skips the 1x1 conv).
    x3 = jax.random.normal(k_x2, (N, C_OUT, L), dtype=jnp.float32)
    params3 = {
        "w_main": 0.2 * jax.random.normal(k_w2, (C_OUT, C_OUT, KS), jnp.float32),
        "b_main": 0.1 * jax.random.normal(k_b2, (C_OUT,), jnp.float32),
    }
    out3 = jax.block_until_ready(convolutional_ar_block(
        x3, params3, kernel_size=KS, pooling=POOL, residual=True))
    ref3 = _reference(x3, params3, kernel_size=KS, pooling=POOL, stride=1, residual=True)
    np.testing.assert_allclose(np.asarray(out3), np.asarray(ref3), rtol=1e-5, atol=1e-5)

    # Config 4: bf16 matmul path (f32 accumulation/epilogue) vs f32 reference (loose tol).
    out4 = jax.block_until_ready(convolutional_ar_block(
        x, params, kernel_size=KS, pooling=POOL, residual=True,
        compute_dtype=jnp.bfloat16))
    np.testing.assert_allclose(np.asarray(out4), np.asarray(ref), rtol=5e-2, atol=5e-2)

    print("KERNEL_OK")
</pallas_src>

<mosaic_0001>
module attributes {stable_mosaic.version = 11 : i64} {
  func.func @kernel(%arg0: i32, %arg1: i32, %arg2: memref<1x1x4x130xf32, #tpu.memory_space<vmem>>, %arg3: memref<8x12xf32, #tpu.memory_space<vmem>>, %arg4: memref<8x1xf32, #tpu.memory_space<vmem>>, %arg5: memref<8x4xf32, #tpu.memory_space<vmem>>, %arg6: memref<8x1xf32, #tpu.memory_space<vmem>>, %arg7: memref<1x8x128xf32, #tpu.memory_space<vmem>>) attributes {dimension_semantics = [#tpu.dimension_semantics<parallel>, #tpu.dimension_semantics<parallel>], iteration_bounds = array<i64: 2, 1>, scalar_prefetch = 0 : i64, scratch_operands = 0 : i64, tpu.core_type = #tpu.core_type<tc>, window_params = [{transform_indices = @transform_0, window_bounds = array<i64: 1, 1, 4, 130>}, {pipeline_mode = #tpu.pipeline_mode<synchronous>, transform_indices = @transform_1, window_bounds = array<i64: 8, 12>}, {pipeline_mode = #tpu.pipeline_mode<synchronous>, transform_indices = @transform_2, window_bounds = array<i64: 8, 1>}, {pipeline_mode = #tpu.pipeline_mode<synchronous>, transform_indices = @transform_3, window_bounds = array<i64: 8, 4>}, {pipeline_mode = #tpu.pipeline_mode<synchronous>, transform_indices = @transform_4, window_bounds = array<i64: 8, 1>}, {transform_indices = @transform_5, window_bounds = array<i64: 1, 8, 128>}]} {
    %c0 = arith.constant 0 : index
    %c0_0 = arith.constant 0 : index
    %c0_1 = arith.constant 0 : index
    %c0_2 = arith.constant 0 : index
    %0 = vector.load %arg2[%c0, %c0_0, %c0_1, %c0_2] : memref<1x1x4x130xf32, #tpu.memory_space<vmem>>, vector<1x1x4x130xf32>
    %1 = vector.shape_cast %0 : vector<1x1x4x130xf32> to vector<4x130xf32>
    %2 = vector.extract_strided_slice %1 {offsets = [0, 0], sizes = [4, 128], strides = [1, 1]} : vector<4x130xf32> to vector<4x128xf32>
    %3 = vector.extract_strided_slice %1 {offsets = [0, 1], sizes = [4, 128], strides = [1, 1]} : vector<4x130xf32> to vector<4x128xf32>
    %4 = vector.extract_strided_slice %1 {offsets = [0, 2], sizes = [4, 128], strides = [1, 1]} : vector<4x130xf32> to vector<4x128xf32>
    %5 = tpu.concatenate %2, %3, %4 in 0 : vector<4x128xf32>, vector<4x128xf32>, vector<4x128xf32> -> vector<12x128xf32>
    %c0_3 = arith.constant 0 : index
    %c0_4 = arith.constant 0 : index
    %6 = vector.load %arg3[%c0_3, %c0_4] : memref<8x12xf32, #tpu.memory_space<vmem>>, vector<8x12xf32>
    %cst = arith.constant dense<0.000000e+00> : vector<8x128xf32>
    %7 = tpu.matmul %6, %5, %cst {dimension_numbers = #tpu.dot_dimension_numbers<[1], [0], [0], [1], [0, 0, 1, 1], [], []>} : vector<8x12xf32>, vector<12x128xf32>, vector<8x128xf32> -> vector<8x128xf32>
    %c0_5 = arith.constant 0 : index
    %c0_6 = arith.constant 0 : index
    %8 = vector.load %arg4[%c0_5, %c0_6] : memref<8x1xf32, #tpu.memory_space<vmem>>, vector<8x1xf32>
    %9 = vector.broadcast %8 : vector<8x1xf32> to vector<8x128xf32>
    %10 = arith.addf %7, %9 : vector<8x128xf32>
    %cst_7 = arith.constant 0.000000e+00 : f32
    %11 = vector.broadcast %cst_7 : f32 to vector<8x128xf32>
    %12 = arith.maximumf %10, %11 : vector<8x128xf32>
    %c0_8 = arith.constant 0 : index
    %c0_9 = arith.constant 0 : index
    %13 = vector.load %arg5[%c0_8, %c0_9] : memref<8x4xf32, #tpu.memory_space<vmem>>, vector<8x4xf32>
    %14 = vector.extract_strided_slice %5 {offsets = [8, 0], sizes = [4, 128], strides = [1, 1]} : vector<12x128xf32> to vector<4x128xf32>
    %cst_10 = arith.constant dense<0.000000e+00> : vector<8x128xf32>
    %15 = tpu.matmul %13, %14, %cst_10 {dimension_numbers = #tpu.dot_dimension_numbers<[1], [0], [0], [1], [0, 0, 1, 1], [], []>} : vector<8x4xf32>, vector<4x128xf32>, vector<8x128xf32> -> vector<8x128xf32>
    %c0_11 = arith.constant 0 : index
    %c0_12 = arith.constant 0 : index
    %16 = vector.load %arg6[%c0_11, %c0_12] : memref<8x1xf32, #tpu.memory_space<vmem>>, vector<8x1xf32>
    %17 = vector.broadcast %16 : vector<8x1xf32> to vector<8x128xf32>
    %18 = arith.addf %15, %17 : vector<8x128xf32>
    %19 = arith.addf %12, %18 : vector<8x128xf32>
    %c0_13 = arith.constant 0 : index
    %c0_14 = arith.constant 0 : index
    %c0_15 = arith.constant 0 : index
    %20 = vector.load %arg7[%c0_13, %c0_14, %c0_15] : memref<1x8x128xf32, #tpu.memory_space<vmem>>, vector<1x8x128xf32>
    %21 = vector.shape_cast %20 : vector<1x8x128xf32> to vector<8x128xf32>
    %22 = vector.shape_cast %19 : vector<8x128xf32> to vector<1x8x128xf32>
    tpu.vector_store %arg7[%c0_13, %c0_14, %c0_15], %22 {strides = array<i32>} : memref<1x8x128xf32, #tpu.memory_space<vmem>>, vector<1x8x128xf32>,
    return
  }
  func.func @transform_0(%arg0: i32, %arg1: i32) -> (i32, i32, i32, i32) {
    %c0_i32 = arith.constant 0 : i32
    %c0_i32_0 = arith.constant 0 : i32
    %c0_i32_1 = arith.constant 0 : i32
    return %arg0, %arg1, %c0_i32, %c0_i32_0 : i32, i32, i32, i32
  }
  func.func @transform_1(%arg0: i32, %arg1: i32) -> (i32, i32) {
    %c0_i32 = arith.constant 0 : i32
    %c0_i32_0 = arith.constant 0 : i32
    %c0_i32_1 = arith.constant 0 : i32
    return %c0_i32, %c0_i32_0 : i32, i32
  }
  func.func @transform_2(%arg0: i32, %arg1: i32) -> (i32, i32) {
    %c0_i32 = arith.constant 0 : i32
    %c0_i32_0 = arith.constant 0 : i32
    %c0_i32_1 = arith.constant 0 : i32
    return %c0_i32, %c0_i32_0 : i32, i32
  }
  func.func @transform_3(%arg0: i32, %arg1: i32) -> (i32, i32) {
    %c0_i32 = arith.constant 0 : i32
    %c0_i32_0 = arith.constant 0 : i32
    %c0_i32_1 = arith.constant 0 : i32
    return %c0_i32, %c0_i32_0 : i32, i32
  }
  func.func @transform_4(%arg0: i32, %arg1: i32) -> (i32, i32) {
    %c0_i32 = arith.constant 0 : i32
    %c0_i32_0 = arith.constant 0 : i32
    %c0_i32_1 = arith.constant 0 : i32
    return %c0_i32, %c0_i32_0 : i32, i32
  }
  func.func @transform_5(%arg0: i32, %arg1: i32) -> (i32, i32, i32) {
    %c0_i32 = arith.constant 0 : i32
    %c0_i32_0 = arith.constant 0 : i32
    return %arg0, %c0_i32, %arg1 : i32, i32, i32
  }
}

</mosaic_0001>

<llo_original>
// kernel: tpu_custom_call.1
$region0: #{tpu_custom_call.1}
  #allocation0 [shape = 'u32[]', space=smem, size = 0x4, offset = 0x4, fixed_abs, tag = 'smem constant byte address 0x4 - core index']
  #allocation1 [shape = 'u32[144,128]{1,0:T(1,128)}', space=vmem, size = 0x12000, scoped, tag = 'internal scratch']
  %s0 = inlined_call_operand.vmem [shape: f32[2,1,4,130], index: 0, kind: input, shape index: {}]
  %s1 = inlined_call_operand.vmem [shape: f32[8,12], index: 1, kind: input, shape index: {}]
  %s2 = inlined_call_operand.vmem [shape: f32[8,1], index: 2, kind: input, shape index: {}]
  %s3 = inlined_call_operand.vmem [shape: f32[8,4], index: 3, kind: input, shape index: {}]
  %s4 = inlined_call_operand.vmem [shape: f32[8,1], index: 4, kind: input, shape index: {}]
  %s5 = inlined_call_operand.hbm [shape: f32[2,8,128], index: 5, kind: output, shape index: {}]
  %s6 = sld [smem:[#allocation0]]
  $region53: #{tpu_custom_call.1} parent=0
    _
  %s8 = ssub.s32 1, %s6
  %s9 = scalar_select 0, %s8, %s6
  $region1: #{tpu_custom_call.1} parent=0
    #allocation2 [shape = 'u8[8192]{0}', space=vmem, size = 0x2000, scoped, tag = 'output window, operand 0']
    #allocation3 [shape = 's32[2]{0}', space=sflag, size = 0x8, scoped, tag = 'scoped memory for tpu_custom_call.1']
    %10 = vsyncpa [#allocation3], 0
    %s11 = scalar_lea.sflag [#allocation3], 1
    %12 = vsyncpa %s11, 0
    loop: start=0, step=1, limit=4
    $region2: #{tpu_custom_call.1} parent=1 // loop_pre_header
      _
    $region3: #{tpu_custom_call.1} parent=1 // loop_header
      %s14 = sphi 0, %s18
      %p15 = scmp.ge.s32.totalorder %s14, 4
      %s21 = sphi 0, %s33
      %s22 = sphi 0, %s29
      %s23 = sphi 0, %s21
      %s24 = sphi 0, %s22
      %s25 = sphi 0, %s23
      %s26 = sphi 0, %s24
      %s38 = sphi 0, %s40
      %s41 = sphi 0, %s38
      %s42 = sphi 0, %s41
      %s58 = sphi 0, %s42
      %s62 = sphi 0, %s62
      %s64 = sphi 0, %s62
      %s65 = sphi 0, %s64
      %s79 = sphi 0, %s65
      %s83 = sphi 0, %s83
      %s85 = sphi 0, %s83
      %s86 = sphi 0, %s85
      %s100 = sphi 0, %s86
      %s104 = sphi 0, %s104
      %s106 = sphi 0, %s104
      %s107 = sphi 0, %s106
      %s121 = sphi 0, %s107
      %s125 = sphi 0, %s125
      %s127 = sphi 0, %s125
      %s128 = sphi 0, %s127
      %s142 = sphi 0, %s128
      %s150 = sphi 0, %s152
      %s153 = sphi 0, %s150
      %s154 = sphi 0, %s153
      %s170 = sphi 0, %s154
    $region4: #{tpu_custom_call.1} parent=1 // loop_header_branch
      %17 = sbr.rel (%p15) target = $region8
    $region5: #{tpu_custom_call.1} parent=1 // loop_body
      %s19 = ssub.s32 %s14, 1
      %s20 = ssub.s32 %s14, 2
      %s27 = sadd.s32 1, %s22
      %p28 = scmp.ge.s32.totalorder %s27, 1
      %s29 = scalar_select %p28, 0, %s27
      %s30 = sadd.s32 1, %s21
      %s31 = scalar_select %p28, %s30, %s21
      %p32 = scmp.ge.s32.totalorder %s31, 2
      %s33 = scalar_select %p32, 0, %s31
      %s34 = ssub.s32 %s21, %s33
      %s35 = ssub.s32 %s22, %s29
      %s36 = sor.u32 %s34, %s35
      %p37 = scmp.eq.s32.totalorder %s36, 0
      %s39 = sadd.s32 %s38, 1
      %s40 = scalar_select %p37, %s38, %s39
      %p43 = pneg %p37
      %p44 = scmp.eq.s32.totalorder %s14, 1
      %p45 = por %p43, %p44
      %p46 = scmp.ne.s32.totalorder %s38, %s41
      %p47 = scmp.eq.s32.totalorder %s14, 0
      %p48 = por %p46, %p47
      %p49 = scmp.ne.s32.totalorder %s38, %s41
      %p50 = scmp.eq.s32.totalorder %s19, 1
      %p51 = por %p49, %p50
      %p52 = scmp.ne.s32.totalorder %s41, %s42
      %p53 = scmp.eq.s32.totalorder %s19, 0
      %p54 = por %p52, %p53
      %p55 = scmp.ne.s32.totalorder %s41, %s42
      %p56 = scmp.eq.s32.totalorder %s20, 1
      %p57 = por %p55, %p56
      %p59 = scmp.ne.s32.totalorder %s42, %s58
      %p60 = scmp.eq.s32.totalorder %s20, 0
      %p61 = por %p59, %p60
      %s63 = sadd.s32 %s62, 1
      %p66 = scmp.eq.s32.totalorder %s14, 1
      %p67 = scmp.ne.s32.totalorder %s62, %s64
      %p68 = scmp.eq.s32.totalorder %s14, 0
      %p69 = por %p67, %p68
      %p70 = scmp.ne.s32.totalorder %s62, %s64
      %p71 = scmp.eq.s32.totalorder %s19, 1
      %p72 = por %p70, %p71
      %p73 = scmp.ne.s32.totalorder %s64, %s65
      %p74 = scmp.eq.s32.totalorder %s19, 0
      %p75 = por %p73, %p74
      %p76 = scmp.ne.s32.totalorder %s64, %s65
      %p77 = scmp.eq.s32.totalorder %s20, 1
      %p78 = por %p76, %p77
      %p80 = scmp.ne.s32.totalorder %s65, %s79
      %p81 = scmp.eq.s32.totalorder %s20, 0
      %p82 = por %p80, %p81
      %s84 = sadd.s32 %s83, 1
      %p87 = scmp.eq.s32.totalorder %s14, 1
      %p88 = scmp.ne.s32.totalorder %s83, %s85
      %p89 = scmp.eq.s32.totalorder %s14, 0
      %p90 = por %p88, %p89
      %p91 = scmp.ne.s32.totalorder %s83, %s85
      %p92 = scmp.eq.s32.totalorder %s19, 1
      %p93 = por %p91, %p92
      %p94 = scmp.ne.s32.totalorder %s85, %s86
      %p95 = scmp.eq.s32.totalorder %s19, 0
      %p96 = por %p94, %p95
      %p97 = scmp.ne.s32.totalorder %s85, %s86
      %p98 = scmp.eq.s32.totalorder %s20, 1
      %p99 = por %p97, %p98
      %p101 = scmp.ne.s32.totalorder %s86, %s100
      %p102 = scmp.eq.s32.totalorder %s20, 0
      %p103 = por %p101, %p102
      %s105 = sadd.s32 %s104, 1
      %p108 = scmp.eq.s32.totalorder %s14, 1
      %p109 = scmp.ne.s32.totalorder %s104, %s106
      %p110 = scmp.eq.s32.totalorder %s14, 0
      %p111 = por %p109, %p110
      %p112 = scmp.ne.s32.totalorder %s104, %s106
      %p113 = scmp.eq.s32.totalorder %s19, 1
      %p114 = por %p112, %p113
      %p115 = scmp.ne.s32.totalorder %s106, %s107
      %p116 = scmp.eq.s32.totalorder %s19, 0
      %p117 = por %p115, %p116
      %p118 = scmp.ne.s32.totalorder %s106, %s107
      %p119 = scmp.eq.s32.totalorder %s20, 1
      %p120 = por %p118, %p119
      %p122 = scmp.ne.s32.totalorder %s107, %s121
      %p123 = scmp.eq.s32.totalorder %s20, 0
      %p124 = por %p122, %p123
      %s126 = sadd.s32 %s125, 1
      %p129 = scmp.eq.s32.totalorder %s14, 1
      %p130 = scmp.ne.s32.totalorder %s125, %s127
      %p131 = scmp.eq.s32.totalorder %s14, 0
      %p132 = por %p130, %p131
      %p133 = scmp.ne.s32.totalorder %s125, %s127
      %p134 = scmp.eq.s32.totalorder %s19, 1
      %p135 = por %p133, %p134
      %p136 = scmp.ne.s32.totalorder %s127, %s128
      %p137 = scmp.eq.s32.totalorder %s19, 0
      %p138 = por %p136, %p137
      %p139 = scmp.ne.s32.totalorder %s127, %s128
      %p140 = scmp.eq.s32.totalorder %s20, 1
      %p141 = por %p139, %p140
      %p143 = scmp.ne.s32.totalorder %s128, %s142
      %p144 = scmp.eq.s32.totalorder %s20, 0
      %p145 = por %p143, %p144
      %s146 = ssub.s32 %s21, %s33
      %s147 = ssub.s32 %s22, %s29
      %s148 = sor.u32 %s146, %s147
      %p149 = scmp.eq.s32.totalorder %s148, 0
      %s151 = sadd.s32 %s150, 1
      %s152 = scalar_select %p149, %s150, %s151
      %p155 = pneg %p149
      %p156 = scmp.eq.s32.totalorder %s14, 1
      %p157 = por %p155, %p156
      %p158 = scmp.ne.s32.totalorder %s150, %s153
      %p159 = scmp.eq.s32.totalorder %s14, 0
      %p160 = por %p158, %p159
      %p161 = scmp.ne.s32.totalorder %s150, %s153
      %p162 = scmp.eq.s32.totalorder %s19, 1
      %p163 = por %p161, %p162
      %p164 = scmp.ne.s32.totalorder %s153, %s154
      %p165 = scmp.eq.s32.totalorder %s19, 0
      %p166 = por %p164, %p165
      %p167 = scmp.ne.s32.totalorder %s153, %s154
      %p168 = scmp.eq.s32.totalorder %s20, 1
      %p169 = por %p167, %p168
      %p171 = scmp.ne.s32.totalorder %s154, %s170
      %p172 = scmp.eq.s32.totalorder %s20, 0
      %p173 = por %p171, %p172
      %p174 = scmp.le.s32.totalorder 1, %s14
      %p175 = scmp.lt.s32.totalorder %s14, 3
      %p176 = pnand %p174, %p175
      %p177 = pneg %p176
      // Predicated region
      $region9: #{tpu_custom_call.1} parent=5 // pred_check
        _
      $region10: #{tpu_custom_call.1} parent=5 // pred_check_branch
        %179 = sbr.rel (%p176) target = $region12
      $region11: #{tpu_custom_call.1} parent=5 // pred_region
        %s180 = ssub.s32 %s14, 1
        // Predicated region
        $region13: #{tpu_custom_call.1} parent=11 // pred_check
          %p181 = pneg %p75
        $region14: #{tpu_custom_call.1} parent=11 // pred_check_branch
          %183 = sbr.rel (%p181) target = $region16
        $region15: #{tpu_custom_call.1} parent=11 // pred_region
          _
        $region16: #{tpu_custom_call.1} parent=11 // pred_fallthru
          _
        // Predicated region
        $region17: #{tpu_custom_call.1} parent=11 // pred_check
          %p184 = pneg %p96
        $region18: #{tpu_custom_call.1} parent=11 // pred_check_branch
          %186 = sbr.rel (%p184) target = $region20
        $region19: #{tpu_custom_call.1} parent=11 // pred_region
          _
        $region20: #{tpu_custom_call.1} parent=11 // pred_fallthru
          _
        // Predicated region
        $region21: #{tpu_custom_call.1} parent=11 // pred_check
          %p187 = pneg %p117
        $region22: #{tpu_custom_call.1} parent=11 // pred_check_branch
          %189 = sbr.rel (%p187) target = $region24
        $region23: #{tpu_custom_call.1} parent=11 // pred_region
          _
        $region24: #{tpu_custom_call.1} parent=11 // pred_fallthru
          _
        // Predicated region
        $region25: #{tpu_custom_call.1} parent=11 // pred_check
          %p190 = pneg %p138
        $region26: #{tpu_custom_call.1} parent=11 // pred_check_branch
          %192 = sbr.rel (%p190) target = $region28
        $region27: #{tpu_custom_call.1} parent=11 // pred_region
          _
        $region28: #{tpu_custom_call.1} parent=11 // pred_fallthru
          _
      $region12: #{tpu_custom_call.1} parent=5 // pred_fallthru
        _
      %p193 = scmp.lt.s32.totalorder %s14, 2
      // Predicated region
      $region29: #{tpu_custom_call.1} parent=5 // pred_check
        %p194 = pneg %p193
      $region30: #{tpu_custom_call.1} parent=5 // pred_check_branch
        %196 = sbr.rel (%p194) target = $region32
      $region31: #{tpu_custom_call.1} parent=5 // pred_region
        // Predicated region
        $region33: #{tpu_custom_call.1} parent=31 // pred_check
          %p197 = pneg %p48
        $region34: #{tpu_custom_call.1} parent=31 // pred_check_branch
          %199 = sbr.rel (%p197) target = $region36
        $region35: #{tpu_custom_call.1} parent=31 // pred_region
          %p200 = scmp.lt.s32.totalorder %s21, 1
          %s201 = scalar_select %p200, %s21, 1
          %p202 = scmp.lt.s32.totalorder %s22, 0
          %s203 = scalar_select %p202, %s22, 0
          %s204 = smul.addr %s203, 2
          %s205 = smul.addr %s201, 2
          %s206 = sadd.s32 %s204, %s205
          %s207 = smul.addr %s206, 4
          %s208 = scalar_lea.vmem %s0, %s207
        $region36: #{tpu_custom_call.1} parent=31 // pred_fallthru
          _
      $region32: #{tpu_custom_call.1} parent=5 // pred_fallthru
        _
      %p209 = scmp.le.s32.totalorder 1, %s14
      %p210 = scmp.lt.s32.totalorder %s14, 3
      %p211 = pnand %p209, %p210
      %p212 = pneg %p211
      // Predicated region
      $region37: #{tpu_custom_call.1} parent=5 // pred_check
        _
      $region38: #{tpu_custom_call.1} parent=5 // pred_check_branch
        %214 = sbr.rel (%p211) target = $region40
      $region39: #{tpu_custom_call.1} parent=5 // pred_region
        %s215 = ssub.s32 %s14, 1
        %p216 = scmp.lt.s32.totalorder %s23, 1
        %s217 = scalar_select %p216, %s23, 1
        %p218 = scmp.lt.s32.totalorder %s24, 0
        %s219 = scalar_select %p218, %s24, 0
        %s220 = smul.addr %s219, 2
        %s221 = smul.addr %s217, 2
        %s222 = sadd.s32 %s220, %s221
        %s223 = smul.addr %s222, 4
        %s224 = scalar_lea.vmem %s0, %s223
        %p225 = pneg %p54
        %p226 = pneg %p51
        %p227 = pneg %p75
        %p228 = pneg %p72
        %p229 = pneg %p96
        %p230 = pneg %p93
        %p231 = pneg %p117
        %p232 = pneg %p114
        %p233 = pneg %p138
        %p234 = pneg %p135
        %p235 = pneg %p166
        %p236 = pneg %p163
        %s237 = sand.u32 %s153, 1
        %s238 = scalar_lea.sflag [#allocation3], %s237
        %s239 = sand.u32 %s153, 1
        %s240 = smul.addr %s239, 8
        %s241 = scalar_lea.vmem [#allocation2], %s240
        %p242 = scmp.lt.s32.totalorder %s23, 1
        %s243 = scalar_select %p242, %s23, 1
        %p244 = scmp.lt.s32.totalorder %s24, 0
        %s245 = scalar_select %p244, %s24, 0
        %s246 = smul.addr %s245, 2
        %s247 = smul.addr %s243, 2
        %s248 = sadd.s32 %s246, %s247
        %s249 = smul.addr %s248, 4
        %s250 = scalar_lea.vmem %s0, %s249
        %v251 = vld [vmem:[%s250] sm:$0xff]
        %v253 = vcombine.low %v251, %v251
        %254 = vrot.lane.b32.xlu0 %v253, 127
        %v255 = vpop.permute.xlu0 %254
        %256 = vrot.lane.b32.xlu0 %v251, 127
        %v257 = vpop.permute.xlu0 %256
        %vm258 = vcmask 1039360
        %v259 = vsel %vm258, %v255, %v257
        %v261 = vcombine.high %v251, %v251
        %262 = vrot.lane.b32.xlu0 %v251, 126
        %v263 = vpop.permute.xlu0 %262
        %264 = vrot.lane.b32.xlu0 %v261, 126
        %v265 = vpop.permute.xlu0 %264
        %vm266 = vcmask 1031168
        %v267 = vsel %vm266, %v263, %v265
        %vm268 = vcmask 1043456
        %v269 = vsel %vm268, %v251, %v259
        %v270 = vld [vmem:[%s1] sm:$0xff]
        %v271 = vld [vmem:[%s2] sm:$0xff]
        %273 = vset.pattern.permute.xlu0 0
        %274 = vperm.xlu0 %273, %v271
        %v275 = vpop.permute.xlu0 %274
        %vm277 = vcmask 97280
        %v279 = vsel %vm277, %v270, 0
        %v281 = vsel %vm268, %v267, 0
        %283 = vmatprep.subr.mxu0 0.0
        %284 = vmatpush1.msra.mxu0 0.0
        %285 = vmatprep.subr.mxu0 0.0
        %286 = vmatpush1.msra.mxu0 0.0
        %287 = vmatprep.subr.mxu0 0.0
        %288 = vmatpush1.msra.mxu0 0.0
        %289 = vmatprep.subr.mxu0 0.0
        %290 = vmatpush1.msra.mxu0 0.0
        %291 = vmatprep.subr.mxu0 0.0
        %292 = vmatpush1.msra.mxu0 0.0
        %293 = vmatprep.subr.mxu0 0.0
        %294 = vmatpush1.msra.mxu0 0.0
        %295 = vmatprep.subr.mxu0 0.0
        %296 = vmatpush1.msra.mxu0 0.0
        %297 = vmatprep.subr.mxu0 0.0
        %298 = vmatpush1.msra.mxu0 0.0
        %299 = vmatprep.subr.mxu0 0.0
        %300 = vmatpush1.msra.mxu0 0.0
        %301 = vmatprep.subr.mxu0 0.0
        %302 = vmatpush1.msra.mxu0 0.0
        %303 = vmatprep.subr.mxu0 0.0
        %304 = vmatpush1.msra.mxu0 0.0
        %305 = vmatprep.subr.mxu0 0.0
        %306 = vmatpush1.msra.mxu0 0.0
        %307 = vmatprep.subr.mxu0 0.0
        %308 = vmatpush1.msra.mxu0 0.0
        %309 = vmatprep.subr.mxu0 0.0
        %310 = vmatpush1.msra.mxu0 0.0
        %311 = vmatprep.subr.mxu0 0.0
        %312 = vmatpush1.msra.mxu0 %v281
        %313 = vmatprep.subr.mxu0 0.0
        %314 = vmatpush1.msra.mxu0 %v269
        %315 = vmatprep.subr.mxu0 0.0
        %316 = vmatpush2.msra.mxu0 0.0
        %317 = vmatprep.subr.mxu0 0.0
        %318 = vmatpush2.msra.mxu0 0.0
        %319 = vmatprep.subr.mxu0 0.0
        %320 = vmatpush2.msra.mxu0 0.0
        %321 = vmatprep.subr.mxu0 0.0
        %322 = vmatpush2.msra.mxu0 0.0
        %323 = vmatprep.subr.mxu0 0.0
        %324 = vmatpush2.msra.mxu0 0.0
        %325 = vmatprep.subr.mxu0 0.0
        %326 = vmatpush2.msra.mxu0 0.0
        %327 = vmatprep.subr.mxu0 0.0
        %328 = vmatpush2.msra.mxu0 0.0
        %329 = vmatprep.subr.mxu0 0.0
        %330 = vmatpush2.msra.mxu0 0.0
        %331 = vmatprep.subr.mxu0 0.0
        %332 = vmatpush2.msra.mxu0 0.0
        %333 = vmatprep.subr.mxu0 0.0
        %334 = vmatpush2.msra.mxu0 0.0
        %335 = vmatprep.subr.mxu0 0.0
        %336 = vmatpush2.msra.mxu0 0.0
        %337 = vmatprep.subr.mxu0 0.0
        %338 = vmatpush2.msra.mxu0 0.0
        %339 = vmatprep.subr.mxu0 0.0
        %340 = vmatpush2.msra.mxu0 0.0
        %341 = vmatprep.subr.mxu0 0.0
        %342 = vmatpush2.msra.mxu0 0.0
        %343 = vmatprep.subr.mxu0 0.0
        %344 = vmatpush2.msra.mxu0 0.0
        %345 = vmatprep.subr.mxu0 0.0
        %346 = vmatpush2.msra.mxu0 0.0
        %347 = vmatprep.mubr.f32.mxu0 0.0
        %348 = vmatmul.mubr.f32.gmra.mxu0 %v279
        %v349 = vpop.f32.mrf.mxu0
        %v350 = vadd.f32 %v275, %v349
        %v351 = vpop.f32.mrf.mxu0
        %352 = vdwg.mxu0
        %v353 = vmax.f32 %v350, 0.0
        %v354 = vld [vmem:[%s3] sm:$0xff]
        %v355 = vld [vmem:[%s4] sm:$0xff]
        %357 = vset.pattern.permute.xlu0 0
        %358 = vperm.xlu0 %357, %v355
        %v359 = vpop.permute.xlu0 %358
        %vm361 = vcmask 31744
        %v363 = vsel %vm361, %v354, 0
        %365 = vmatprep.subr.mxu0 0.0
        %366 = vmatpush1.msra.mxu0 0.0
        %367 = vmatprep.subr.mxu0 0.0
        %368 = vmatpush1.msra.mxu0 0.0
        %369 = vmatprep.subr.mxu0 0.0
        %370 = vmatpush1.msra.mxu0 0.0
        %371 = vmatprep.subr.mxu0 0.0
        %372 = vmatpush1.msra.mxu0 0.0
        %373 = vmatprep.subr.mxu0 0.0
        %374 = vmatpush1.msra.mxu0 0.0
        %375 = vmatprep.subr.mxu0 0.0
        %376 = vmatpush1.msra.mxu0 0.0
        %377 = vmatprep.subr.mxu0 0.0
        %378 = vmatpush1.msra.mxu0 0.0
        %379 = vmatprep.subr.mxu0 0.0
        %380 = vmatpush1.msra.mxu0 0.0
        %381 = vmatprep.subr.mxu0 0.0
        %382 = vmatpush1.msra.mxu0 0.0
        %383 = vmatprep.subr.mxu0 0.0
        %384 = vmatpush1.msra.mxu0 0.0
        %385 = vmatprep.subr.mxu0 0.0
        %386 = vmatpush1.msra.mxu0 0.0
        %387 = vmatprep.subr.mxu0 0.0
        %388 = vmatpush1.msra.mxu0 0.0
        %389 = vmatprep.subr.mxu0 0.0
        %390 = vmatpush1.msra.mxu0 0.0
        %391 = vmatprep.subr.mxu0 0.0
        %392 = vmatpush1.msra.mxu0 0.0
        %393 = vmatprep.subr.mxu0 0.0
        %394 = vmatpush1.msra.mxu0 0.0
        %395 = vmatprep.subr.mxu0 0.0
        %396 = vmatpush1.msra.mxu0 %v281
        %397 = vmatprep.subr.mxu0 0.0
        %398 = vmatpush2.msra.mxu0 0.0
        %399 = vmatprep.subr.mxu0 0.0
        %400 = vmatpush2.msra.mxu0 0.0
        %401 = vmatprep.subr.mxu0 0.0
        %402 = vmatpush2.msra.mxu0 0.0
        %403 = vmatprep.subr.mxu0 0.0
        %404 = vmatpush2.msra.mxu0 0.0
        %405 = vmatprep.subr.mxu0 0.0
        %406 = vmatpush2.msra.mxu0 0.0
        %407 = vmatprep.subr.mxu0 0.0
        %408 = vmatpush2.msra.mxu0 0.0
        %409 = vmatprep.subr.mxu0 0.0
        %410 = vmatpush2.msra.mxu0 0.0
        %411 = vmatprep.subr.mxu0 0.0
        %412 = vmatpush2.msra.mxu0 0.0
        %413 = vmatprep.subr.mxu0 0.0
        %414 = vmatpush2.msra.mxu0 0.0
        %415 = vmatprep.subr.mxu0 0.0
        %416 = vmatpush2.msra.mxu0 0.0
        %417 = vmatprep.subr.mxu0 0.0
        %418 = vmatpush2.msra.mxu0 0.0
        %419 = vmatprep.subr.mxu0 0.0
        %420 = vmatpush2.msra.mxu0 0.0
        %421 = vmatprep.subr.mxu0 0.0
        %422 = vmatpush2.msra.mxu0 0.0
        %423 = vmatprep.subr.mxu0 0.0
        %424 = vmatpush2.msra.mxu0 0.0
        %425 = vmatprep.subr.mxu0 0.0
        %426 = vmatpush2.msra.mxu0 0.0
        %427 = vmatprep.subr.mxu0 0.0
        %428 = vmatpush2.msra.mxu0 0.0
        %429 = vmatprep.mubr.f32.mxu0 0.0
        %430 = vmatmul.mubr.f32.gmra.mxu0 %v363
        %v431 = vpop.f32.mrf.mxu0
        %v432 = vadd.f32 %v359, %v431
        %v433 = vpop.f32.mrf.mxu0
        %434 = vdwg.mxu0
        %v435 = vadd.f32 %v353, %v432
        %436 = vst [vmem:[%s241] sm:$0xff] %v435
        %s437 = sand.u32 %s153, 1
        %s438 = scalar_lea.sflag [#allocation3], %s437
        %s439 = sand.u32 %s153, 1
        %s440 = smul.addr %s439, 8
        %s441 = scalar_lea.vmem [#allocation2], %s440
        // Predicated region
        $region41: #{tpu_custom_call.1} parent=39 // pred_check
          %p442 = pneg %p163
        $region42: #{tpu_custom_call.1} parent=39 // pred_check_branch
          %444 = sbr.rel (%p442) target = $region44
        $region43: #{tpu_custom_call.1} parent=39 // pred_region
          %s446 = ssub.s32 128, 128
          %447 = vsyncadd %s438, %s446
          %s448 = sadd.s32 %s24, %s23
          %s449 = smul.addr %s448, 128
          %s450 = scalar_lea.hbm %s5, %s449
          %s452 = sshll.u32 %s441, 4
          %s453 = int_to_ptr.vmem [resolvable:$true] %s452
          %455 = dma.vmem_to_hbm [thread:$0]  %s453, 128, %s450, %s438
        $region44: #{tpu_custom_call.1} parent=39 // pred_fallthru
          _
      $region40: #{tpu_custom_call.1} parent=5 // pred_fallthru
        _
      %p456 = scmp.le.s32.totalorder 2, %s14
      // Predicated region
      $region45: #{tpu_custom_call.1} parent=5 // pred_check
        %p457 = pneg %p456
      $region46: #{tpu_custom_call.1} parent=5 // pred_check_branch
        %459 = sbr.rel (%p457) target = $region48
      $region47: #{tpu_custom_call.1} parent=5 // pred_region
        %s460 = ssub.s32 %s14, 2
        // Predicated region
        $region49: #{tpu_custom_call.1} parent=47 // pred_check
          %p461 = pneg %p169
        $region50: #{tpu_custom_call.1} parent=47 // pred_check_branch
          %463 = sbr.rel (%p461) target = $region52
        $region51: #{tpu_custom_call.1} parent=47 // pred_region
          %s464 = sand.u32 %s154, 1
          %s465 = scalar_lea.sflag [#allocation3], %s464
          %s466 = sand.u32 %s154, 1
          %s467 = smul.addr %s466, 8
          %s468 = scalar_lea.vmem [#allocation2], %s467
          %469 = dma.done %s465, 128
        $region52: #{tpu_custom_call.1} parent=47 // pred_fallthru
          _
      $region48: #{tpu_custom_call.1} parent=5 // pred_fallthru
        _
    $region6: #{tpu_custom_call.1} parent=1 // loop_footer
      %s18 = sadd.s32 1, %s14
    $region7: #{tpu_custom_call.1} parent=1 // loop_footer_branch
      %13 = sbr.rel target = $region3
    $region8: #{tpu_custom_call.1} parent=1 // loop_exit
      _
    %470 = vsyncpa [#allocation3], 1
    %s471 = scalar_lea.sflag [#allocation3], 1
    %472 = vsyncpa %s471, 1

</llo_original>
